<compile_context>
chip_gen: v5e
topology: v5e:2x2
jax: 0.10.0
libtpu: 0.0.40
codegen_flags: <defaults>
</compile_context>

<pallas_src>
import jax
import jax.numpy as jnp
from jax.experimental import pallas as pl
from jax.experimental.pallas import tpu as pltpu

_LANE = 128


def _round_up(n, m):
    return ((n + m - 1) // m) * m


def _netgauss_kernel(x_ref, w1_ref, b1_ref, w2_ref, b2_ref, w3_ref, b3_ref,
                     w4_ref, b4_ref, gt_ref, o_ref):
    # Transposed layout: x_ref (1, TB); weights in PyTorch (out, in) layout
    # (pre-cast to the matmul dtype in the wrapper); biases as (out, 1) f32
    # columns broadcasting along the lane (batch) axis.
    mm_dtype = w2_ref.dtype
    xt = x_ref[...]                                                 # (1, TB) f32

    # lin1 (in_features == 1): outer product -> broadcast FMA on the VPU (f32).
    h = jnp.maximum(w1_ref[...] * xt + b1_ref[...], 0.0)           # (NL, TB)

    # lin2 / lin3 (+ ReLU) and lin4 on the MXU: (out, in) @ (in, TB).
    # Operands cast to the (bf16) weight dtype right at the dot; accumulation
    # and all elementwise math stay f32 (v5e has no bf16 VPU/EUP path).
    h = jnp.maximum(
        jnp.dot(w2_ref[...], h.astype(mm_dtype),
                preferred_element_type=jnp.float32) + b2_ref[...], 0.0)
    h = jnp.maximum(
        jnp.dot(w3_ref[...], h.astype(mm_dtype),
                preferred_element_type=jnp.float32) + b3_ref[...], 0.0)
    logits = (jnp.dot(w4_ref[...], h.astype(mm_dtype),
                      preferred_element_type=jnp.float32)
              + b4_ref[...])                                        # (OD, TB)

    # softmax over the feature axis (sublanes) == torch softmax(dim=1), with
    # the normalization folded past the Gauss matmul:
    #   tx = (G^T @ e) * (1 / sum(e)).
    # The reciprocal runs on the otherwise-idle EUP slot; no (OD, TB) divide.
    m = jnp.max(logits, axis=0, keepdims=True)                      # (1, TB)
    e = jnp.exp(logits - m)                                         # (OD, TB) f32
    inv = pl.reciprocal(jnp.sum(e, axis=0, keepdims=True), approx=True)

    # Gauss-basis head: (2, OD) @ (OD, TB) -> (2, TB), then normalize.
    tx = jnp.dot(gt_ref[...], e.astype(mm_dtype),
                 preferred_element_type=jnp.float32) * inv          # (2, TB)

    # Row 0 passes through, row 1 gets exp().  Computing exp on both rows and
    # selecting keeps a single lane-dense full-tile store (EUP has slack).
    row_is_exp = jax.lax.broadcasted_iota(jnp.int32, tx.shape, 0) == 1
    o_ref[...] = jnp.where(row_is_exp, jnp.exp(tx), tx)


def net_gauss_1d_forward(x, params, gauss_basis, *, max_tile_b=32768,
                         min_tiles=2, matmul_dtype=jnp.bfloat16,
                         core_parallel=False, return_transposed=False):
    """Pallas forward for NetGauss1d.

    x: (B, 1) float32
    params: (w1, b1, w2, b2, w3, b3, w4, b4) in PyTorch nn.Linear layout,
            i.e. weights (out_features, in_features), biases (out_features,).
    gauss_basis: (outDim, 2) float32.
    Returns: (B, 2) float32 (or (2, B) if return_transposed=True).
    """
    w1, b1, w2, b2, w3, b3, w4, b4 = params
    batch = x.shape[0]
    n_latent = w1.shape[0]
    out_dim = w4.shape[0]

    # Balanced batch tiling (lanes): enough tiles that (a) tile_b <= max_tile_b
    # and (b) there are at least `min_tiles` grid steps when the batch allows
    # (so v7x's 2 TensorCores both get work), while keeping the last tile
    # mostly full so padded columns stay a small fraction of the work.
    max_tile_b = _round_up(max(max_tile_b, _LANE), _LANE)
    b_pad0 = _round_up(max(batch, 1), _LANE)
    n_tiles = max(pl.cdiv(b_pad0, max_tile_b),
                  min_tiles if b_pad0 >= min_tiles * _LANE else 1)
    tile_b = min(_round_up(pl.cdiv(b_pad0, n_tiles), _LANE), max_tile_b)
    grid_b = pl.cdiv(b_pad0, tile_b)
    b_pad = grid_b * tile_b

    # Transposed, zero-padded input: (1, b_pad), batch on lanes.  (B, 1) ->
    # (1, B) is a pure reshape (no data movement); pad is the only extra pass.
    xt = jnp.pad(x.astype(jnp.float32).reshape(1, -1),
                 ((0, 0), (0, b_pad - batch)))

    # Biases as (out, 1) f32 columns; matmul weights + Gauss basis pre-cast
    # once to the MXU dtype; Gauss basis transposed to (2, outDim).
    w1f = w1.astype(jnp.float32)
    b1c = b1.astype(jnp.float32).reshape(n_latent, 1)
    b2c = b2.astype(jnp.float32).reshape(n_latent, 1)
    b3c = b3.astype(jnp.float32).reshape(n_latent, 1)
    b4c = b4.astype(jnp.float32).reshape(out_dim, 1)
    w2c = w2.astype(matmul_dtype)
    w3c = w3.astype(matmul_dtype)
    w4c = w4.astype(matmul_dtype)
    gtc = gauss_basis.T.astype(matmul_dtype)

    def resident(shape):
        # Full-array block + constant index_map: stays VMEM-resident across
        # all grid steps (no re-DMA per batch tile).
        return pl.BlockSpec(shape, lambda i: (0, 0))

    # Batch tiles are independent.  CORE_PARALLEL forces the cross-TensorCore
    # split on v7x; plain "parallel" is the safe default on all generations.
    dim_sem = (pltpu.CORE_PARALLEL if core_parallel else "parallel",)

    out_t = pl.pallas_call(
        _netgauss_kernel,
        out_shape=jax.ShapeDtypeStruct((2, b_pad), jnp.float32),
        grid_spec=pltpu.PrefetchScalarGridSpec(
            num_scalar_prefetch=0,
            grid=(grid_b,),
            in_specs=[
                pl.BlockSpec((1, tile_b), lambda i: (0, i)),        # x^T
                resident((n_latent, 1)), resident((n_latent, 1)),   # W1, b1
                resident((n_latent, n_latent)), resident((n_latent, 1)),
                resident((n_latent, n_latent)), resident((n_latent, 1)),
                resident((out_dim, n_latent)), resident((out_dim, 1)),
                resident((2, out_dim)),                             # G^T
            ],
            out_specs=pl.BlockSpec((2, tile_b), lambda i: (0, i)),
        ),
        compiler_params=pltpu.CompilerParams(
            dimension_semantics=dim_sem,
            # At tile_b <= 32768 the per-step footprint (double-buffered
            # (1,TB)+(2,TB) f32 I/O plus a few (8,TB)/(4,TB) intermediates)
            # is a handful of MiB, safe on every generation incl. v7x.
            vmem_limit_bytes=32 * 1024 * 1024),
    )(xt, w1f, b1c, w2c, b2c, w3c, b3c, w4c, b4c, gtc)

    if return_transposed:
        return out_t[:, :batch]          # (2, B): consumer can fuse its own layout
    # Layout glue back to the PyTorch output shape (B, 2).
    return out_t[:, :batch].T


def _init_params(key, n_latent, out_dim):
    """nn.Linear-style init (PyTorch layout: W (out,in), b (out,)) + Gauss basis."""
    dims = [(1, n_latent), (n_latent, n_latent), (n_latent, n_latent),
            (n_latent, out_dim)]
    params = []
    for fan_in, fan_out in dims:
        key, kw, kb = jax.random.split(key, 3)
        s = 1.0 / jnp.sqrt(jnp.float32(fan_in))
        w = jax.random.uniform(kw, (fan_out, fan_in), jnp.float32, -s, s)
        b = jax.random.uniform(kb, (fan_out,), jnp.float32, -s, s)
        params.extend([w, b])
    key, kg = jax.random.split(key)
    gauss = 20.0 * (jax.random.uniform(kg, (out_dim, 2), jnp.float32) - 0.5)
    return tuple(params), gauss


def _reference_forward(x, params, gauss_basis, matmul_dtype=jnp.float32):
    """Pure-JAX reference.  `matmul_dtype` mirrors the kernel's MXU dtype so the
    comparison isolates kernel bugs from the (intentional) bf16 matmul rounding."""
    w1, b1, w2, b2, w3, b3, w4, b4 = params

    def mm(a, b):
        return jnp.dot(a.astype(matmul_dtype), b.astype(matmul_dtype),
                       preferred_element_type=jnp.float32)

    h = jax.nn.relu(x @ w1.T + b1)                 # in_features == 1: f32 VPU path
    h = jax.nn.relu(mm(h, w2.T) + b2)
    h = jax.nn.relu(mm(h, w3.T) + b3)
    logits = mm(h, w4.T) + b4
    e = jnp.exp(logits - logits.max(axis=1, keepdims=True))
    tx = mm(e, gauss_basis) / e.sum(axis=1, keepdims=True)   # == softmax @ basis
    return jnp.concatenate([tx[:, 0:1], jnp.exp(tx[:, 1:2])], axis=1)


if __name__ == "__main__":
    OUT_DIM = 4      # NetGauss1d default (NetTransformer outDim must match)
    N_LATENT = 8     # NetTransformer default
    BATCH = 300      # not a multiple of 128 -> exercises padding + 2-step grid

    key = jax.random.PRNGKey(0)
    key, kx = jax.random.split(key)
    x = jax.random.normal(kx, (BATCH, 1), jnp.float32)
    params, gauss_basis = _init_params(key, N_LATENT, OUT_DIM)

    out = net_gauss_1d_forward(x, params, gauss_basis)
    out = jax.block_until_ready(out)

    # Reference with matching bf16 matmul rounding; remaining delta comes only
    # from the approximate EUP reciprocal (amplified by the final exp), hence
    # the relaxed tolerance.
    ref = _reference_forward(x, params, gauss_basis, matmul_dtype=jnp.bfloat16)
    assert out.shape == (BATCH, 2), out.shape
    assert jnp.all(jnp.isfinite(out))
    assert jnp.allclose(out, ref, atol=2e-2, rtol=2e-2), \
        float(jnp.max(jnp.abs(out - ref)))

    print("KERNEL_OK")
</pallas_src>

<mosaic_0001>
module attributes {stable_mosaic.version = 11 : i64} {
  func.func @_netgauss_kernel(%arg0: i32, %arg1: memref<1x256xf32, #tpu.memory_space<vmem>>, %arg2: memref<8x1xf32, #tpu.memory_space<vmem>>, %arg3: memref<8x1xf32, #tpu.memory_space<vmem>>, %arg4: memref<8x8xbf16, #tpu.memory_space<vmem>>, %arg5: memref<8x1xf32, #tpu.memory_space<vmem>>, %arg6: memref<8x8xbf16, #tpu.memory_space<vmem>>, %arg7: memref<8x1xf32, #tpu.memory_space<vmem>>, %arg8: memref<4x8xbf16, #tpu.memory_space<vmem>>, %arg9: memref<4x1xf32, #tpu.memory_space<vmem>>, %arg10: memref<2x4xbf16, #tpu.memory_space<vmem>>, %arg11: memref<2x256xf32, #tpu.memory_space<vmem>>) attributes {dimension_semantics = [#tpu.dimension_semantics<parallel>], iteration_bounds = array<i64: 2>, scalar_prefetch = 0 : i64, scratch_operands = 0 : i64, tpu.core_type = #tpu.core_type<tc>, window_params = [{transform_indices = @transform_0, window_bounds = array<i64: 1, 256>}, {pipeline_mode = #tpu.pipeline_mode<synchronous>, transform_indices = @transform_1, window_bounds = array<i64: 8, 1>}, {pipeline_mode = #tpu.pipeline_mode<synchronous>, transform_indices = @transform_2, window_bounds = array<i64: 8, 1>}, {pipeline_mode = #tpu.pipeline_mode<synchronous>, transform_indices = @transform_3, window_bounds = array<i64: 8, 8>}, {pipeline_mode = #tpu.pipeline_mode<synchronous>, transform_indices = @transform_4, window_bounds = array<i64: 8, 1>}, {pipeline_mode = #tpu.pipeline_mode<synchronous>, transform_indices = @transform_5, window_bounds = array<i64: 8, 8>}, {pipeline_mode = #tpu.pipeline_mode<synchronous>, transform_indices = @transform_6, window_bounds = array<i64: 8, 1>}, {pipeline_mode = #tpu.pipeline_mode<synchronous>, transform_indices = @transform_7, window_bounds = array<i64: 4, 8>}, {pipeline_mode = #tpu.pipeline_mode<synchronous>, transform_indices = @transform_8, window_bounds = array<i64: 4, 1>}, {pipeline_mode = #tpu.pipeline_mode<synchronous>, transform_indices = @transform_9, window_bounds = array<i64: 2, 4>}, {transform_indices = @transform_10, window_bounds = array<i64: 2, 256>}]} {
    %c0 = arith.constant 0 : index
    %c0_0 = arith.constant 0 : index
    %0 = vector.load %arg1[%c0, %c0_0] : memref<1x256xf32, #tpu.memory_space<vmem>>, vector<1x256xf32>
    %c0_1 = arith.constant 0 : index
    %c0_2 = arith.constant 0 : index
    %1 = vector.load %arg2[%c0_1, %c0_2] : memref<8x1xf32, #tpu.memory_space<vmem>>, vector<8x1xf32>
    %2 = vector.broadcast %1 : vector<8x1xf32> to vector<8x256xf32>
    %3 = vector.broadcast %0 : vector<1x256xf32> to vector<8x256xf32>
    %4 = arith.mulf %2, %3 : vector<8x256xf32>
    %c0_3 = arith.constant 0 : index
    %c0_4 = arith.constant 0 : index
    %5 = vector.load %arg3[%c0_3, %c0_4] : memref<8x1xf32, #tpu.memory_space<vmem>>, vector<8x1xf32>
    %6 = vector.broadcast %5 : vector<8x1xf32> to vector<8x256xf32>
    %7 = arith.addf %4, %6 : vector<8x256xf32>
    %cst = arith.constant 0.000000e+00 : f32
    %8 = vector.broadcast %cst : f32 to vector<8x256xf32>
    %9 = arith.maximumf %7, %8 : vector<8x256xf32>
    %c0_5 = arith.constant 0 : index
    %c0_6 = arith.constant 0 : index
    %10 = vector.load %arg4[%c0_5, %c0_6] : memref<8x8xbf16, #tpu.memory_space<vmem>>, vector<8x8xbf16>
    %11 = arith.truncf %9 : vector<8x256xf32> to vector<8x256xbf16>
    %cst_7 = arith.constant dense<0.000000e+00> : vector<8x256xf32>
    %12 = tpu.matmul %10, %11, %cst_7 {dimension_numbers = #tpu.dot_dimension_numbers<[1], [0], [0], [1], [0, 0, 1, 1], [], []>} : vector<8x8xbf16>, vector<8x256xbf16>, vector<8x256xf32> -> vector<8x256xf32>
    %c0_8 = arith.constant 0 : index
    %c0_9 = arith.constant 0 : index
    %13 = vector.load %arg5[%c0_8, %c0_9] : memref<8x1xf32, #tpu.memory_space<vmem>>, vector<8x1xf32>
    %14 = vector.broadcast %13 : vector<8x1xf32> to vector<8x256xf32>
    %15 = arith.addf %12, %14 : vector<8x256xf32>
    %cst_10 = arith.constant 0.000000e+00 : f32
    %16 = vector.broadcast %cst_10 : f32 to vector<8x256xf32>
    %17 = arith.maximumf %15, %16 : vector<8x256xf32>
    %c0_11 = arith.constant 0 : index
    %c0_12 = arith.constant 0 : index
    %18 = vector.load %arg6[%c0_11, %c0_12] : memref<8x8xbf16, #tpu.memory_space<vmem>>, vector<8x8xbf16>
    %19 = arith.truncf %17 : vector<8x256xf32> to vector<8x256xbf16>
    %cst_13 = arith.constant dense<0.000000e+00> : vector<8x256xf32>
    %20 = tpu.matmul %18, %19, %cst_13 {dimension_numbers = #tpu.dot_dimension_numbers<[1], [0], [0], [1], [0, 0, 1, 1], [], []>} : vector<8x8xbf16>, vector<8x256xbf16>, vector<8x256xf32> -> vector<8x256xf32>
    %c0_14 = arith.constant 0 : index
    %c0_15 = arith.constant 0 : index
    %21 = vector.load %arg7[%c0_14, %c0_15] : memref<8x1xf32, #tpu.memory_space<vmem>>, vector<8x1xf32>
    %22 = vector.broadcast %21 : vector<8x1xf32> to vector<8x256xf32>
    %23 = arith.addf %20, %22 : vector<8x256xf32>
    %cst_16 = arith.constant 0.000000e+00 : f32
    %24 = vector.broadcast %cst_16 : f32 to vector<8x256xf32>
    %25 = arith.maximumf %23, %24 : vector<8x256xf32>
    %c0_17 = arith.constant 0 : index
    %c0_18 = arith.constant 0 : index
    %26 = vector.load %arg8[%c0_17, %c0_18] : memref<4x8xbf16, #tpu.memory_space<vmem>>, vector<4x8xbf16>
    %27 = arith.truncf %25 : vector<8x256xf32> to vector<8x256xbf16>
    %cst_19 = arith.constant dense<0.000000e+00> : vector<4x256xf32>
    %28 = tpu.matmul %26, %27, %cst_19 {dimension_numbers = #tpu.dot_dimension_numbers<[1], [0], [0], [1], [0, 0, 1, 1], [], []>} : vector<4x8xbf16>, vector<8x256xbf16>, vector<4x256xf32> -> vector<4x256xf32>
    %c0_20 = arith.constant 0 : index
    %c0_21 = arith.constant 0 : index
    %29 = vector.load %arg9[%c0_20, %c0_21] : memref<4x1xf32, #tpu.memory_space<vmem>>, vector<4x1xf32>
    %30 = vector.broadcast %29 : vector<4x1xf32> to vector<4x256xf32>
    %31 = arith.addf %28, %30 : vector<4x256xf32>
    %cst_22 = arith.constant dense<0xFF800000> : vector<256xf32>
    %32 = vector.multi_reduction <maximumf>, %31, %cst_22 [0] : vector<4x256xf32> to vector<256xf32>
    %33 = vector.shape_cast %32 : vector<256xf32> to vector<1x256xf32>
    %34 = vector.broadcast %33 : vector<1x256xf32> to vector<4x256xf32>
    %35 = arith.subf %31, %34 : vector<4x256xf32>
    %36 = math.exp %35 : vector<4x256xf32>
    %cst_23 = arith.constant dense<0.000000e+00> : vector<256xf32>
    %37 = vector.multi_reduction <add>, %36, %cst_23 [0] : vector<4x256xf32> to vector<256xf32>
    %38 = vector.shape_cast %37 : vector<256xf32> to vector<1x256xf32>
    %39 = tpu.reciprocal %38 {approx = true} : vector<1x256xf32> -> vector<1x256xf32>
    %c0_24 = arith.constant 0 : index
    %c0_25 = arith.constant 0 : index
    %40 = vector.load %arg10[%c0_24, %c0_25] : memref<2x4xbf16, #tpu.memory_space<vmem>>, vector<2x4xbf16>
    %41 = arith.truncf %36 : vector<4x256xf32> to vector<4x256xbf16>
    %cst_26 = arith.constant dense<0.000000e+00> : vector<2x256xf32>
    %42 = tpu.matmul %40, %41, %cst_26 {dimension_numbers = #tpu.dot_dimension_numbers<[1], [0], [0], [1], [0, 0, 1, 1], [], []>} : vector<2x4xbf16>, vector<4x256xbf16>, vector<2x256xf32> -> vector<2x256xf32>
    %43 = vector.broadcast %39 : vector<1x256xf32> to vector<2x256xf32>
    %44 = arith.mulf %42, %43 : vector<2x256xf32>
    %45 = tpu.iota {dimensions = array<i32: 0>} : vector<2x256xi32>
    %c1_i32 = arith.constant 1 : i32
    %46 = vector.broadcast %c1_i32 : i32 to vector<2x256xi32>
    %47 = arith.cmpi eq, %45, %46 : vector<2x256xi32>
    %48 = math.exp %44 : vector<2x256xf32>
    %49 = arith.select %47, %48, %44 : vector<2x256xi1>, vector<2x256xf32>
    %c0_27 = arith.constant 0 : index
    %c0_28 = arith.constant 0 : index
    %50 = vector.load %arg11[%c0_27, %c0_28] : memref<2x256xf32, #tpu.memory_space<vmem>>, vector<2x256xf32>
    tpu.vector_store %arg11[%c0_27, %c0_28], %49 {strides = array<i32>} : memref<2x256xf32, #tpu.memory_space<vmem>>, vector<2x256xf32>,
    return
  }
  func.func @transform_0(%arg0: i32) -> (i32, i32) {
    %c0_i32 = arith.constant 0 : i32
    %c0_i32_0 = arith.constant 0 : i32
    return %c0_i32, %arg0 : i32, i32
  }
  func.func @transform_1(%arg0: i32) -> (i32, i32) {
    %c0_i32 = arith.constant 0 : i32
    %c0_i32_0 = arith.constant 0 : i32
    %c0_i32_1 = arith.constant 0 : i32
    return %c0_i32, %c0_i32_0 : i32, i32
  }
  func.func @transform_2(%arg0: i32) -> (i32, i32) {
    %c0_i32 = arith.constant 0 : i32
    %c0_i32_0 = arith.constant 0 : i32
    %c0_i32_1 = arith.constant 0 : i32
    return %c0_i32, %c0_i32_0 : i32, i32
  }
  func.func @transform_3(%arg0: i32) -> (i32, i32) {
    %c0_i32 = arith.constant 0 : i32
    %c0_i32_0 = arith.constant 0 : i32
    %c0_i32_1 = arith.constant 0 : i32
    return %c0_i32, %c0_i32_0 : i32, i32
  }
  func.func @transform_4(%arg0: i32) -> (i32, i32) {
    %c0_i32 = arith.constant 0 : i32
    %c0_i32_0 = arith.constant 0 : i32
    %c0_i32_1 = arith.constant 0 : i32
    return %c0_i32, %c0_i32_0 : i32, i32
  }
  func.func @transform_5(%arg0: i32) -> (i32, i32) {
    %c0_i32 = arith.constant 0 : i32
    %c0_i32_0 = arith.constant 0 : i32
    %c0_i32_1 = arith.constant 0 : i32
    return %c0_i32, %c0_i32_0 : i32, i32
  }
  func.func @transform_6(%arg0: i32) -> (i32, i32) {
    %c0_i32 = arith.constant 0 : i32
    %c0_i32_0 = arith.constant 0 : i32
    %c0_i32_1 = arith.constant 0 : i32
    return %c0_i32, %c0_i32_0 : i32, i32
  }
  func.func @transform_7(%arg0: i32) -> (i32, i32) {
    %c0_i32 = arith.constant 0 : i32
    %c0_i32_0 = arith.constant 0 : i32
    %c0_i32_1 = arith.constant 0 : i32
    return %c0_i32, %c0_i32_0 : i32, i32
  }
  func.func @transform_8(%arg0: i32) -> (i32, i32) {
    %c0_i32 = arith.constant 0 : i32
    %c0_i32_0 = arith.constant 0 : i32
    %c0_i32_1 = arith.constant 0 : i32
    return %c0_i32, %c0_i32_0 : i32, i32
  }
  func.func @transform_9(%arg0: i32) -> (i32, i32) {
    %c0_i32 = arith.constant 0 : i32
    %c0_i32_0 = arith.constant 0 : i32
    %c0_i32_1 = arith.constant 0 : i32
    return %c0_i32, %c0_i32_0 : i32, i32
  }
  func.func @transform_10(%arg0: i32) -> (i32, i32) {
    %c0_i32 = arith.constant 0 : i32
    %c0_i32_0 = arith.constant 0 : i32
    return %c0_i32, %arg0 : i32, i32
  }
}

</mosaic_0001>

<llo_original>
// kernel: tpu_custom_call.1
$region0: #{tpu_custom_call.1}
  #allocation0 [shape = 'u32[]', space=smem, size = 0x4, offset = 0x4, fixed_abs, tag = 'smem constant byte address 0x4 - core index']
  #allocation1 [shape = 'u32[72,128]{1,0:T(1,128)}', space=vmem, size = 0x9000, scoped, tag = 'internal scratch']
  %s0 = inlined_call_operand.vmem [shape: f32[1,512], index: 0, kind: input, shape index: {}]
  %s1 = inlined_call_operand.vmem [shape: f32[8,1], index: 1, kind: input, shape index: {}]
  %s2 = inlined_call_operand.vmem [shape: f32[8,1], index: 2, kind: input, shape index: {}]
  %s3 = inlined_call_operand.vmem [shape: bf16[8,8], index: 3, kind: input, shape index: {}]
  %s4 = inlined_call_operand.vmem [shape: f32[8,1], index: 4, kind: input, shape index: {}]
  %s5 = inlined_call_operand.vmem [shape: bf16[8,8], index: 5, kind: input, shape index: {}]
  %s6 = inlined_call_operand.vmem [shape: f32[8,1], index: 6, kind: input, shape index: {}]
  %s7 = inlined_call_operand.vmem [shape: bf16[4,8], index: 7, kind: input, shape index: {}]
  %s8 = inlined_call_operand.vmem [shape: f32[4,1], index: 8, kind: input, shape index: {}]
  %s9 = inlined_call_operand.vmem [shape: bf16[2,4], index: 9, kind: input, shape index: {}]
  %s10 = inlined_call_operand.hbm [shape: f32[2,512], index: 10, kind: output, shape index: {}]
  %s11 = sld [smem:[#allocation0]]
  $region73: #{tpu_custom_call.1} parent=0
    _
  %s13 = ssub.s32 1, %s11
  %s14 = scalar_select 0, %s13, %s11
  $region1: #{tpu_custom_call.1} parent=0
    #allocation2 [shape = 'u8[4096]{0}', space=vmem, size = 0x1000, scoped, tag = 'output window, operand 0']
    #allocation3 [shape = 's32[2]{0}', space=sflag, size = 0x8, scoped, tag = 'scoped memory for tpu_custom_call.1']
    %15 = vsyncpa [#allocation3], 0
    %s16 = scalar_lea.sflag [#allocation3], 1
    %17 = vsyncpa %s16, 0
    loop: start=0, step=1, limit=4
    $region2: #{tpu_custom_call.1} parent=1 // loop_pre_header
      _
    $region3: #{tpu_custom_call.1} parent=1 // loop_header
      %s19 = sphi 0, %s23
      %p20 = scmp.ge.s32.totalorder %s19, 4
      %s29 = sphi 0, %s31
      %s32 = sphi 0, %s29
      %s33 = sphi 0, %s32
      %s49 = sphi 0, %s33
      %s53 = sphi 0, %s53
      %s55 = sphi 0, %s53
      %s56 = sphi 0, %s55
      %s70 = sphi 0, %s56
      %s74 = sphi 0, %s74
      %s76 = sphi 0, %s74
      %s77 = sphi 0, %s76
      %s91 = sphi 0, %s77
      %s95 = sphi 0, %s95
      %s97 = sphi 0, %s95
      %s98 = sphi 0, %s97
      %s112 = sphi 0, %s98
      %s116 = sphi 0, %s116
      %s118 = sphi 0, %s116
      %s119 = sphi 0, %s118
      %s133 = sphi 0, %s119
      %s137 = sphi 0, %s137
      %s139 = sphi 0, %s137
      %s140 = sphi 0, %s139
      %s154 = sphi 0, %s140
      %s158 = sphi 0, %s158
      %s160 = sphi 0, %s158
      %s161 = sphi 0, %s160
      %s175 = sphi 0, %s161
      %s179 = sphi 0, %s179
      %s181 = sphi 0, %s179
      %s182 = sphi 0, %s181
      %s196 = sphi 0, %s182
      %s200 = sphi 0, %s200
      %s202 = sphi 0, %s200
      %s203 = sphi 0, %s202
      %s217 = sphi 0, %s203
      %s221 = sphi 0, %s221
      %s223 = sphi 0, %s221
      %s224 = sphi 0, %s223
      %s238 = sphi 0, %s224
      %s244 = sphi 0, %s246
      %s247 = sphi 0, %s244
      %s248 = sphi 0, %s247
      %s264 = sphi 0, %s248
    $region4: #{tpu_custom_call.1} parent=1 // loop_header_branch
      %22 = sbr.rel (%p20) target = $region8
    $region5: #{tpu_custom_call.1} parent=1 // loop_body
      %s24 = ssub.s32 %s19, 1
      %s25 = ssub.s32 %s19, 2
      %s26 = sadd.s32 %s19, 1
      %s27 = ssub.s32 %s19, %s26
      %p28 = scmp.eq.s32.totalorder %s27, 0
      %s30 = sadd.s32 %s29, 1
      %s31 = scalar_select %p28, %s29, %s30
      %p34 = pneg %p28
      %p35 = scmp.eq.s32.totalorder %s19, 1
      %p36 = por %p34, %p35
      %p37 = scmp.ne.s32.totalorder %s29, %s32
      %p38 = scmp.eq.s32.totalorder %s19, 0
      %p39 = por %p37, %p38
      %p40 = scmp.ne.s32.totalorder %s29, %s32
      %p41 = scmp.eq.s32.totalorder %s24, 1
      %p42 = por %p40, %p41
      %p43 = scmp.ne.s32.totalorder %s32, %s33
      %p44 = scmp.eq.s32.totalorder %s24, 0
      %p45 = por %p43, %p44
      %p46 = scmp.ne.s32.totalorder %s32, %s33
      %p47 = scmp.eq.s32.totalorder %s25, 1
      %p48 = por %p46, %p47
      %p50 = scmp.ne.s32.totalorder %s33, %s49
      %p51 = scmp.eq.s32.totalorder %s25, 0
      %p52 = por %p50, %p51
      %s54 = sadd.s32 %s53, 1
      %p57 = scmp.eq.s32.totalorder %s19, 1
      %p58 = scmp.ne.s32.totalorder %s53, %s55
      %p59 = scmp.eq.s32.totalorder %s19, 0
      %p60 = por %p58, %p59
      %p61 = scmp.ne.s32.totalorder %s53, %s55
      %p62 = scmp.eq.s32.totalorder %s24, 1
      %p63 = por %p61, %p62
      %p64 = scmp.ne.s32.totalorder %s55, %s56
      %p65 = scmp.eq.s32.totalorder %s24, 0
      %p66 = por %p64, %p65
      %p67 = scmp.ne.s32.totalorder %s55, %s56
      %p68 = scmp.eq.s32.totalorder %s25, 1
      %p69 = por %p67, %p68
      %p71 = scmp.ne.s32.totalorder %s56, %s70
      %p72 = scmp.eq.s32.totalorder %s25, 0
      %p73 = por %p71, %p72
      %s75 = sadd.s32 %s74, 1
      %p78 = scmp.eq.s32.totalorder %s19, 1
      %p79 = scmp.ne.s32.totalorder %s74, %s76
      %p80 = scmp.eq.s32.totalorder %s19, 0
      %p81 = por %p79, %p80
      %p82 = scmp.ne.s32.totalorder %s74, %s76
      %p83 = scmp.eq.s32.totalorder %s24, 1
      %p84 = por %p82, %p83
      %p85 = scmp.ne.s32.totalorder %s76, %s77
      %p86 = scmp.eq.s32.totalorder %s24, 0
      %p87 = por %p85, %p86
      %p88 = scmp.ne.s32.totalorder %s76, %s77
      %p89 = scmp.eq.s32.totalorder %s25, 1
      %p90 = por %p88, %p89
      %p92 = scmp.ne.s32.totalorder %s77, %s91
      %p93 = scmp.eq.s32.totalorder %s25, 0
      %p94 = por %p92, %p93
      %s96 = sadd.s32 %s95, 1
      %p99 = scmp.eq.s32.totalorder %s19, 1
      %p100 = scmp.ne.s32.totalorder %s95, %s97
      %p101 = scmp.eq.s32.totalorder %s19, 0
      %p102 = por %p100, %p101
      %p103 = scmp.ne.s32.totalorder %s95, %s97
      %p104 = scmp.eq.s32.totalorder %s24, 1
      %p105 = por %p103, %p104
      %p106 = scmp.ne.s32.totalorder %s97, %s98
      %p107 = scmp.eq.s32.totalorder %s24, 0
      %p108 = por %p106, %p107
      %p109 = scmp.ne.s32.totalorder %s97, %s98
      %p110 = scmp.eq.s32.totalorder %s25, 1
      %p111 = por %p109, %p110
      %p113 = scmp.ne.s32.totalorder %s98, %s112
      %p114 = scmp.eq.s32.totalorder %s25, 0
      %p115 = por %p113, %p114
      %s117 = sadd.s32 %s116, 1
      %p120 = scmp.eq.s32.totalorder %s19, 1
      %p121 = scmp.ne.s32.totalorder %s116, %s118
      %p122 = scmp.eq.s32.totalorder %s19, 0
      %p123 = por %p121, %p122
      %p124 = scmp.ne.s32.totalorder %s116, %s118
      %p125 = scmp.eq.s32.totalorder %s24, 1
      %p126 = por %p124, %p125
      %p127 = scmp.ne.s32.totalorder %s118, %s119
      %p128 = scmp.eq.s32.totalorder %s24, 0
      %p129 = por %p127, %p128
      %p130 = scmp.ne.s32.totalorder %s118, %s119
      %p131 = scmp.eq.s32.totalorder %s25, 1
      %p132 = por %p130, %p131
      %p134 = scmp.ne.s32.totalorder %s119, %s133
      %p135 = scmp.eq.s32.totalorder %s25, 0
      %p136 = por %p134, %p135
      %s138 = sadd.s32 %s137, 1
      %p141 = scmp.eq.s32.totalorder %s19, 1
      %p142 = scmp.ne.s32.totalorder %s137, %s139
      %p143 = scmp.eq.s32.totalorder %s19, 0
      %p144 = por %p142, %p143
      %p145 = scmp.ne.s32.totalorder %s137, %s139
      %p146 = scmp.eq.s32.totalorder %s24, 1
      %p147 = por %p145, %p146
      %p148 = scmp.ne.s32.totalorder %s139, %s140
      %p149 = scmp.eq.s32.totalorder %s24, 0
      %p150 = por %p148, %p149
      %p151 = scmp.ne.s32.totalorder %s139, %s140
      %p152 = scmp.eq.s32.totalorder %s25, 1
      %p153 = por %p151, %p152
      %p155 = scmp.ne.s32.totalorder %s140, %s154
      %p156 = scmp.eq.s32.totalorder %s25, 0
      %p157 = por %p155, %p156
      %s159 = sadd.s32 %s158, 1
      %p162 = scmp.eq.s32.totalorder %s19, 1
      %p163 = scmp.ne.s32.totalorder %s158, %s160
      %p164 = scmp.eq.s32.totalorder %s19, 0
      %p165 = por %p163, %p164
      %p166 = scmp.ne.s32.totalorder %s158, %s160
      %p167 = scmp.eq.s32.totalorder %s24, 1
      %p168 = por %p166, %p167
      %p169 = scmp.ne.s32.totalorder %s160, %s161
      %p170 = scmp.eq.s32.totalorder %s24, 0
      %p171 = por %p169, %p170
      %p172 = scmp.ne.s32.totalorder %s160, %s161
      %p173 = scmp.eq.s32.totalorder %s25, 1
      %p174 = por %p172, %p173
      %p176 = scmp.ne.s32.totalorder %s161, %s175
      %p177 = scmp.eq.s32.totalorder %s25, 0
      %p178 = por %p176, %p177
      %s180 = sadd.s32 %s179, 1
      %p183 = scmp.eq.s32.totalorder %s19, 1
      %p184 = scmp.ne.s32.totalorder %s179, %s181
      %p185 = scmp.eq.s32.totalorder %s19, 0
      %p186 = por %p184, %p185
      %p187 = scmp.ne.s32.totalorder %s179, %s181
      %p188 = scmp.eq.s32.totalorder %s24, 1
      %p189 = por %p187, %p188
      %p190 = scmp.ne.s32.totalorder %s181, %s182
      %p191 = scmp.eq.s32.totalorder %s24, 0
      %p192 = por %p190, %p191
      %p193 = scmp.ne.s32.totalorder %s181, %s182
      %p194 = scmp.eq.s32.totalorder %s25, 1
      %p195 = por %p193, %p194
      %p197 = scmp.ne.s32.totalorder %s182, %s196
      %p198 = scmp.eq.s32.totalorder %s25, 0
      %p199 = por %p197, %p198
      %s201 = sadd.s32 %s200, 1
      %p204 = scmp.eq.s32.totalorder %s19, 1
      %p205 = scmp.ne.s32.totalorder %s200, %s202
      %p206 = scmp.eq.s32.totalorder %s19, 0
      %p207 = por %p205, %p206
      %p208 = scmp.ne.s32.totalorder %s200, %s202
      %p209 = scmp.eq.s32.totalorder %s24, 1
      %p210 = por %p208, %p209
      %p211 = scmp.ne.s32.totalorder %s202, %s203
      %p212 = scmp.eq.s32.totalorder %s24, 0
      %p213 = por %p211, %p212
      %p214 = scmp.ne.s32.totalorder %s202, %s203
      %p215 = scmp.eq.s32.totalorder %s25, 1
      %p216 = por %p214, %p215
      %p218 = scmp.ne.s32.totalorder %s203, %s217
      %p219 = scmp.eq.s32.totalorder %s25, 0
      %p220 = por %p218, %p219
      %s222 = sadd.s32 %s221, 1
      %p225 = scmp.eq.s32.totalorder %s19, 1
      %p226 = scmp.ne.s32.totalorder %s221, %s223
      %p227 = scmp.eq.s32.totalorder %s19, 0
      %p228 = por %p226, %p227
      %p229 = scmp.ne.s32.totalorder %s221, %s223
      %p230 = scmp.eq.s32.totalorder %s24, 1
      %p231 = por %p229, %p230
      %p232 = scmp.ne.s32.totalorder %s223, %s224
      %p233 = scmp.eq.s32.totalorder %s24, 0
      %p234 = por %p232, %p233
      %p235 = scmp.ne.s32.totalorder %s223, %s224
      %p236 = scmp.eq.s32.totalorder %s25, 1
      %p237 = por %p235, %p236
      %p239 = scmp.ne.s32.totalorder %s224, %s238
      %p240 = scmp.eq.s32.totalorder %s25, 0
      %p241 = por %p239, %p240
      %s242 = ssub.s32 %s19, %s26
      %p243 = scmp.eq.s32.totalorder %s242, 0
      %s245 = sadd.s32 %s244, 1
      %s246 = scalar_select %p243, %s244, %s245
      %p249 = pneg %p243
      %p250 = scmp.eq.s32.totalorder %s19, 1
      %p251 = por %p249, %p250
      %p252 = scmp.ne.s32.totalorder %s244, %s247
      %p253 = scmp.eq.s32.totalorder %s19, 0
      %p254 = por %p252, %p253
      %p255 = scmp.ne.s32.totalorder %s244, %s247
      %p256 = scmp.eq.s32.totalorder %s24, 1
      %p257 = por %p255, %p256
      %p258 = scmp.ne.s32.totalorder %s247, %s248
      %p259 = scmp.eq.s32.totalorder %s24, 0
      %p260 = por %p258, %p259
      %p261 = scmp.ne.s32.totalorder %s247, %s248
      %p262 = scmp.eq.s32.totalorder %s25, 1
      %p263 = por %p261, %p262
      %p265 = scmp.ne.s32.totalorder %s248, %s264
      %p266 = scmp.eq.s32.totalorder %s25, 0
      %p267 = por %p265, %p266
      %p268 = scmp.le.s32.totalorder 1, %s19
      %p269 = scmp.lt.s32.totalorder %s19, 3
      %p270 = pnand %p268, %p269
      %p271 = pneg %p270
      // Predicated region
      $region9: #{tpu_custom_call.1} parent=5 // pred_check
        _
      $region10: #{tpu_custom_call.1} parent=5 // pred_check_branch
        %273 = sbr.rel (%p270) target = $region12
      $region11: #{tpu_custom_call.1} parent=5 // pred_region
        %s274 = ssub.s32 %s19, 1
        // Predicated region
        $region13: #{tpu_custom_call.1} parent=11 // pred_check
          %p275 = pneg %p66
        $region14: #{tpu_custom_call.1} parent=11 // pred_check_branch
          %277 = sbr.rel (%p275) target = $region16
        $region15: #{tpu_custom_call.1} parent=11 // pred_region
          _
        $region16: #{tpu_custom_call.1} parent=11 // pred_fallthru
          _
        // Predicated region
        $region17: #{tpu_custom_call.1} parent=11 // pred_check
          %p278 = pneg %p87
        $region18: #{tpu_custom_call.1} parent=11 // pred_check_branch
          %280 = sbr.rel (%p278) target = $region20
        $region19: #{tpu_custom_call.1} parent=11 // pred_region
          _
        $region20: #{tpu_custom_call.1} parent=11 // pred_fallthru
          _
        // Predicated region
        $region21: #{tpu_custom_call.1} parent=11 // pred_check
          %p281 = pneg %p108
        $region22: #{tpu_custom_call.1} parent=11 // pred_check_branch
          %283 = sbr.rel (%p281) target = $region24
        $region23: #{tpu_custom_call.1} parent=11 // pred_region
          _
        $region24: #{tpu_custom_call.1} parent=11 // pred_fallthru
          _
        // Predicated region
        $region25: #{tpu_custom_call.1} parent=11 // pred_check
          %p284 = pneg %p129
        $region26: #{tpu_custom_call.1} parent=11 // pred_check_branch
          %286 = sbr.rel (%p284) target = $region28
        $region27: #{tpu_custom_call.1} parent=11 // pred_region
          _
        $region28: #{tpu_custom_call.1} parent=11 // pred_fallthru
          _
        // Predicated region
        $region29: #{tpu_custom_call.1} parent=11 // pred_check
          %p287 = pneg %p150
        $region30: #{tpu_custom_call.1} parent=11 // pred_check_branch
          %289 = sbr.rel (%p287) target = $region32
        $region31: #{tpu_custom_call.1} parent=11 // pred_region
          _
        $region32: #{tpu_custom_call.1} parent=11 // pred_fallthru
          _
        // Predicated region
        $region33: #{tpu_custom_call.1} parent=11 // pred_check
          %p290 = pneg %p171
        $region34: #{tpu_custom_call.1} parent=11 // pred_check_branch
          %292 = sbr.rel (%p290) target = $region36
        $region35: #{tpu_custom_call.1} parent=11 // pred_region
          _
        $region36: #{tpu_custom_call.1} parent=11 // pred_fallthru
          _
        // Predicated region
        $region37: #{tpu_custom_call.1} parent=11 // pred_check
          %p293 = pneg %p192
        $region38: #{tpu_custom_call.1} parent=11 // pred_check_branch
          %295 = sbr.rel (%p293) target = $region40
        $region39: #{tpu_custom_call.1} parent=11 // pred_region
          _
        $region40: #{tpu_custom_call.1} parent=11 // pred_fallthru
          _
        // Predicated region
        $region41: #{tpu_custom_call.1} parent=11 // pred_check
          %p296 = pneg %p213
        $region42: #{tpu_custom_call.1} parent=11 // pred_check_branch
          %298 = sbr.rel (%p296) target = $region44
        $region43: #{tpu_custom_call.1} parent=11 // pred_region
          _
        $region44: #{tpu_custom_call.1} parent=11 // pred_fallthru
          _
        // Predicated region
        $region45: #{tpu_custom_call.1} parent=11 // pred_check
          %p299 = pneg %p234
        $region46: #{tpu_custom_call.1} parent=11 // pred_check_branch
          %301 = sbr.rel (%p299) target = $region48
        $region47: #{tpu_custom_call.1} parent=11 // pred_region
          _
        $region48: #{tpu_custom_call.1} parent=11 // pred_fallthru
          _
      $region12: #{tpu_custom_call.1} parent=5 // pred_fallthru
        _
      %p302 = scmp.lt.s32.totalorder %s19, 2
      // Predicated region
      $region49: #{tpu_custom_call.1} parent=5 // pred_check
        %p303 = pneg %p302
      $region50: #{tpu_custom_call.1} parent=5 // pred_check_branch
        %305 = sbr.rel (%p303) target = $region52
      $region51: #{tpu_custom_call.1} parent=5 // pred_region
        // Predicated region
        $region53: #{tpu_custom_call.1} parent=51 // pred_check
          %p306 = pneg %p39
        $region54: #{tpu_custom_call.1} parent=51 // pred_check_branch
          %308 = sbr.rel (%p306) target = $region56
        $region55: #{tpu_custom_call.1} parent=51 // pred_region
          %s309 = smul.u32 2, %s19
          %p310 = scmp.lt.s32.totalorder %s309, 3
          %s311 = scalar_select %p310, %s309, 3
          %s312 = scalar_lea.vmem %s0, %s311
          %s313 = smul.u32 2, %s19
        $region56: #{tpu_custom_call.1} parent=51 // pred_fallthru
          _
      $region52: #{tpu_custom_call.1} parent=5 // pred_fallthru
        _
      %p314 = scmp.le.s32.totalorder 1, %s19
      %p315 = scmp.lt.s32.totalorder %s19, 3
      %p316 = pnand %p314, %p315
      %p317 = pneg %p316
      // Predicated region
      $region57: #{tpu_custom_call.1} parent=5 // pred_check
        _
      $region58: #{tpu_custom_call.1} parent=5 // pred_check_branch
        %319 = sbr.rel (%p316) target = $region60
      $region59: #{tpu_custom_call.1} parent=5 // pred_region
        %s320 = ssub.s32 %s19, 1
        %s321 = smul.u32 2, %s24
        %p322 = scmp.lt.s32.totalorder %s321, 3
        %s323 = scalar_select %p322, %s321, 3
        %s324 = scalar_lea.vmem %s0, %s323
        %p325 = pneg %p45
        %p326 = pneg %p42
        %p327 = pneg %p66
        %p328 = pneg %p63
        %p329 = pneg %p87
        %p330 = pneg %p84
        %p331 = pneg %p108
        %p332 = pneg %p105
        %p333 = pneg %p129
        %p334 = pneg %p126
        %p335 = pneg %p150
        %p336 = pneg %p147
        %p337 = pneg %p171
        %p338 = pneg %p168
        %p339 = pneg %p192
        %p340 = pneg %p189
        %p341 = pneg %p213
        %p342 = pneg %p210
        %p343 = pneg %p234
        %p344 = pneg %p231
        %p345 = pneg %p260
        %p346 = pneg %p257
        %s347 = sand.u32 %s247, 1
        %s348 = scalar_lea.sflag [#allocation3], %s347
        %s349 = sand.u32 %s247, 1
        %s350 = smul.addr %s349, 4
        %s351 = scalar_lea.vmem [#allocation2], %s350
        %s352 = smul.u32 2, %s24
        %p353 = scmp.lt.s32.totalorder %s352, 3
        %s354 = scalar_select %p353, %s352, 3
        %s355 = scalar_lea.vmem %s0, %s354
        %s356 = smul.u32 2, %s24
        %s357 = smul.u32 2, %s24
        %v359 = vld [vmem:[%s355] sm:$0x3]
        %v360 = vld [vmem:[%s1] sm:$0xff]
        %362 = vset.pattern.permute.xlu0 0
        %363 = vperm.xlu0 %362, %v360
        %v364 = vpop.permute.xlu0 %363
        %v367 = vperm.slane %v359, 0
        %v368 = vperm.slane %v359, 1
        %v371 = vmul.f32 %v364, %v367
        %v372 = vmul.f32 %v364, %v368
        %v373 = vld [vmem:[%s2] sm:$0xff]
        %375 = vset.pattern.permute.xlu0 0
        %376 = vperm.xlu0 %375, %v373
        %v377 = vpop.permute.xlu0 %376
        %v379 = vadd.f32 %v371, %v377
        %v380 = vadd.f32 %v372, %v377
        %v381 = vmax.f32 %v379, 0.0
        %v382 = vmax.f32 %v380, 0.0
        %v383 = vld [vmem:[%s3] sm:$0xf]
        %v384 = vpack.c.bf16 %v381, %v381
        %v385 = vpack.c.bf16 %v382, %v382
        %v386 = vld [vmem:[%s4] sm:$0xff]
        %388 = vset.pattern.permute.xlu0 0
        %389 = vperm.xlu0 %388, %v386
        %v390 = vpop.permute.xlu0 %389
        %vm392 = vcmask 64512
        %v394 = vsel %vm392, %v383, 0
        %vm396 = vcmask 1043456
        %v398 = vsel %vm396, %v384, 0
        %v401 = vsel %vm396, %v385, 0
        %403 = vmatpush.bf16.msra.mxu0 0
        %404 = vmatpush.bf16.msra.mxu0 0
        %405 = vmatpush.bf16.msra.mxu0 0
        %406 = vmatpush.bf16.msra.mxu0 0
        %407 = vmatpush.bf16.msra.mxu0 0
        %408 = vmatpush.bf16.msra.mxu0 0
        %409 = vmatpush.bf16.msra.mxu0 0
        %410 = vmatpush.bf16.msra.mxu0 %v398
        %411 = vmatmul.bf16.gmra.mxu0 %v394
        %v412 = vpop.f32.mrf.mxu0
        %v413 = vadd.f32 %v390, %v412
        %v414 = vpop.f32.mrf.mxu0
        %415 = vdwg.mxu0
        %416 = vmatpush.bf16.msra.mxu0 0
        %417 = vmatpush.bf16.msra.mxu0 0
        %418 = vmatpush.bf16.msra.mxu0 0
        %419 = vmatpush.bf16.msra.mxu0 0
        %420 = vmatpush.bf16.msra.mxu0 0
        %421 = vmatpush.bf16.msra.mxu0 0
        %422 = vmatpush.bf16.msra.mxu0 0
        %423 = vmatpush.bf16.msra.mxu0 %v401
        %424 = vmatmul.bf16.gmra.mxu0 %v394
        %v425 = vpop.f32.mrf.mxu0
        %v426 = vadd.f32 %v390, %v425
        %v427 = vpop.f32.mrf.mxu0
        %428 = vdwg.mxu0
        %v429 = vmax.f32 %v413, 0.0
        %v430 = vmax.f32 %v426, 0.0
        %v431 = vld [vmem:[%s5] sm:$0xf]
        %v432 = vpack.c.bf16 %v429, %v429
        %v433 = vpack.c.bf16 %v430, %v430
        %v434 = vld [vmem:[%s6] sm:$0xff]
        %436 = vset.pattern.permute.xlu0 0
        %437 = vperm.xlu0 %436, %v434
        %v438 = vpop.permute.xlu0 %437
        %v441 = vsel %vm392, %v431, 0
        %v444 = vsel %vm396, %v432, 0
        %v447 = vsel %vm396, %v433, 0
        %449 = vmatpush.bf16.msra.mxu0 0
        %450 = vmatpush.bf16.msra.mxu0 0
        %451 = vmatpush.bf16.msra.mxu0 0
        %452 = vmatpush.bf16.msra.mxu0 0
        %453 = vmatpush.bf16.msra.mxu0 0
        %454 = vmatpush.bf16.msra.mxu0 0
        %455 = vmatpush.bf16.msra.mxu0 0
        %456 = vmatpush.bf16.msra.mxu0 %v444
        %457 = vmatmul.bf16.gmra.mxu0 %v441
        %v458 = vpop.f32.mrf.mxu0
        %v459 = vadd.f32 %v438, %v458
        %v460 = vpop.f32.mrf.mxu0
        %461 = vdwg.mxu0
        %462 = vmatpush.bf16.msra.mxu0 0
        %463 = vmatpush.bf16.msra.mxu0 0
        %464 = vmatpush.bf16.msra.mxu0 0
        %465 = vmatpush.bf16.msra.mxu0 0
        %466 = vmatpush.bf16.msra.mxu0 0
        %467 = vmatpush.bf16.msra.mxu0 0
        %468 = vmatpush.bf16.msra.mxu0 0
        %469 = vmatpush.bf16.msra.mxu0 %v447
        %470 = vmatmul.bf16.gmra.mxu0 %v441
        %v471 = vpop.f32.mrf.mxu0
        %v472 = vadd.f32 %v438, %v471
        %v473 = vpop.f32.mrf.mxu0
        %474 = vdwg.mxu0
        %v475 = vmax.f32 %v459, 0.0
        %v476 = vmax.f32 %v472, 0.0
        %v477 = vld [vmem:[%s7] sm:$0x3]
        %v478 = vpack.c.bf16 %v475, %v475
        %v479 = vpack.c.bf16 %v476, %v476
        %v480 = vld [vmem:[%s8] sm:$0xf]
        %482 = vset.pattern.permute.xlu0 0
        %483 = vperm.xlu0 %482, %v480
        %v484 = vpop.permute.xlu0 %483
        %v487 = vsel %vm392, %v477, 0
        %v490 = vsel %vm396, %v478, 0
        %v493 = vsel %vm396, %v479, 0
        %495 = vmatpush.bf16.msra.mxu0 0
        %496 = vmatpush.bf16.msra.mxu0 0
        %497 = vmatpush.bf16.msra.mxu0 0
        %498 = vmatpush.bf16.msra.mxu0 0
        %499 = vmatpush.bf16.msra.mxu0 0
        %500 = vmatpush.bf16.msra.mxu0 0
        %501 = vmatpush.bf16.msra.mxu0 0
        %502 = vmatpush.bf16.msra.mxu0 %v490
        %503 = vmatmul.bf16.gmra.mxu0 %v487
        %v504 = vpop.f32.mrf.mxu0
        %v505 = vadd.f32 %v484, %v504
        %v506 = vpop.f32.mrf.mxu0
        %507 = vdwg.mxu0
        %508 = vmatpush.bf16.msra.mxu0 0
        %509 = vmatpush.bf16.msra.mxu0 0
        %510 = vmatpush.bf16.msra.mxu0 0
        %511 = vmatpush.bf16.msra.mxu0 0
        %512 = vmatpush.bf16.msra.mxu0 0
        %513 = vmatpush.bf16.msra.mxu0 0
        %514 = vmatpush.bf16.msra.mxu0 0
        %515 = vmatpush.bf16.msra.mxu0 %v493
        %516 = vmatmul.bf16.gmra.mxu0 %v487
        %v517 = vpop.f32.mrf.mxu0
        %v518 = vadd.f32 %v484, %v517
        %v519 = vpop.f32.mrf.mxu0
        %520 = vdwg.mxu0
        %v521 = vsel %vm396, %v505, -inf
        %v522 = vrot.slane %v521, 4
        %v523 = vmax.f32 %v521, %v522
        %v524 = vrot.slane %v523, 2
        %v525 = vmax.f32 %v523, %v524
        %v526 = vrot.slane %v525, 1
        %v527 = vmax.f32 %v525, %v526
        %v528 = vsel %vm396, %v518, -inf
        %v529 = vrot.slane %v528, 4
        %v530 = vmax.f32 %v528, %v529
        %v531 = vrot.slane %v530, 2
        %v532 = vmax.f32 %v530, %v531
        %v533 = vrot.slane %v532, 1
        %v534 = vmax.f32 %v532, %v533
        %v535 = vsub.f32 %v505, %v527
        %v536 = vsub.f32 %v518, %v534
        %v537 = vmul.f32 %v535, 1.442695
        %v538 = vpow.pop %v537
        %v539 = vmul.f32 %v536, 1.442695
        %v540 = vpow.pop %v539
        %v541 = vsel %vm396, %v538, 0.0
        %v542 = vrot.slane %v541, 4
        %v543 = vadd.f32 %v541, %v542
        %v544 = vrot.slane %v543, 2
        %v545 = vadd.f32 %v543, %v544
        %v546 = vrot.slane %v545, 1
        %v547 = vadd.f32 %v545, %v546
        %v548 = vsel %vm396, %v540, 0.0
        %v549 = vrot.slane %v548, 4
        %v550 = vadd.f32 %v548, %v549
        %v551 = vrot.slane %v550, 2
        %v552 = vadd.f32 %v550, %v551
        %v553 = vrot.slane %v552, 1
        %v554 = vadd.f32 %v552, %v553
        %v555 = vrcp.pop %v547
        %v556 = vrcp.pop %v554
        %v557 = vld [vmem:[%s9] sm:$0x1]
        %v558 = vpack.c.bf16 %v538, %v538
        %v559 = vpack.c.bf16 %v540, %v540
        %vm560 = vcmask 31744
        %v562 = vsel %vm560, %v557, 0
        %vm564 = vcmask 1041408
        %v566 = vsel %vm564, %v558, 0
        %v569 = vsel %vm564, %v559, 0
        %571 = vmatpush.bf16.msra.mxu0 0
        %572 = vmatpush.bf16.msra.mxu0 0
        %573 = vmatpush.bf16.msra.mxu0 0
        %574 = vmatpush.bf16.msra.mxu0 0
        %575 = vmatpush.bf16.msra.mxu0 0
        %576 = vmatpush.bf16.msra.mxu0 0
        %577 = vmatpush.bf16.msra.mxu0 0
        %578 = vmatpush.bf16.msra.mxu0 %v566
        %579 = vmatmul.bf16.gmra.mxu0 %v562
        %v580 = vpop.f32.mrf.mxu0
        %v581 = vadd.f32 0.0, %v580
        %v582 = vpop.f32.mrf.mxu0
        %583 = vdwg.mxu0
        %584 = vmatpush.bf16.msra.mxu0 0
        %585 = vmatpush.bf16.msra.mxu0 0
        %586 = vmatpush.bf16.msra.mxu0 0
        %587 = vmatpush.bf16.msra.mxu0 0
        %588 = vmatpush.bf16.msra.mxu0 0
        %589 = vmatpush.bf16.msra.mxu0 0
        %590 = vmatpush.bf16.msra.mxu0 0
        %591 = vmatpush.bf16.msra.mxu0 %v569
        %592 = vmatmul.bf16.gmra.mxu0 %v562
        %v593 = vpop.f32.mrf.mxu0
        %v594 = vadd.f32 0.0, %v593
        %v595 = vpop.f32.mrf.mxu0
        %596 = vdwg.mxu0
        %v597 = vmul.f32 %v581, %v555
        %v598 = vmul.f32 %v594, %v556
        %v599 = vlaneseq
        %v600 = vshrl.u32 %v599, 7
        %vm601 = vcmp.eq.s32.totalorder %v600, 1
        %v602 = vmul.f32 %v597, 1.442695
        %v603 = vpow.pop %v602
        %v604 = vmul.f32 %v598, 1.442695
        %v605 = vpow.pop %v604
        %v606 = vsel %vm601, %v603, %v597
        %v607 = vsel %vm601, %v605, %v598
        %v610 = vrot.slane %v607, 6
        %v611 = vsel %vm564, %v606, %v610
        %613 = vst [vmem:[%s351] sm:$0xf] %v611
        %s614 = sand.u32 %s247, 1
        %s615 = scalar_lea.sflag [#allocation3], %s614
        %s616 = sand.u32 %s247, 1
        %s617 = smul.addr %s616, 4
        %s618 = scalar_lea.vmem [#allocation2], %s617
        // Predicated region
        $region61: #{tpu_custom_call.1} parent=59 // pred_check
          %p619 = pneg %p257
        $region62: #{tpu_custom_call.1} parent=59 // pred_check_branch
          %621 = sbr.rel (%p619) target = $region64
        $region63: #{tpu_custom_call.1} parent=59 // pred_region
          %s622 = smul.u32 2, %s24
          %624 = vsyncadd %s615, 0
          %s625 = smul.addr %s622, 2
          %s626 = scalar_lea.hbm %s10, %s625
          %s628 = sshll.u32 %s618, 4
          %s629 = int_to_ptr.vmem [resolvable:$true] %s628
          %s630 = sshll.u32 %s626, 4
          %s631 = int_to_ptr.hbm [resolvable:$true] %s630
          %633 = dma.vmem_to_hbm [thread:$0]  %s629, 64, %s631, %s615
        $region64: #{tpu_custom_call.1} parent=59 // pred_fallthru
          _
      $region60: #{tpu_custom_call.1} parent=5 // pred_fallthru
        _
      %p634 = scmp.le.s32.totalorder 2, %s19
      // Predicated region
      $region65: #{tpu_custom_call.1} parent=5 // pred_check
        %p635 = pneg %p634
      $region66: #{tpu_custom_call.1} parent=5 // pred_check_branch
        %637 = sbr.rel (%p635) target = $region68
      $region67: #{tpu_custom_call.1} parent=5 // pred_region
        %s638 = ssub.s32 %s19, 2
        // Predicated region
        $region69: #{tpu_custom_call.1} parent=67 // pred_check
          %p639 = pneg %p263
        $region70: #{tpu_custom_call.1} parent=67 // pred_check_branch
          %641 = sbr.rel (%p639) target = $region72
        $region71: #{tpu_custom_call.1} parent=67 // pred_region
          %s642 = sand.u32 %s248, 1
          %s643 = scalar_lea.sflag [#allocation3], %s642
          %s644 = sand.u32 %s248, 1
          %s645 = smul.addr %s644, 4
          %s646 = scalar_lea.vmem [#allocation2], %s645
          %648 = dma.done %s643, 64
        $region72: #{tpu_custom_call.1} parent=67 // pred_fallthru
          _
      $region68: #{tpu_custom_call.1} parent=5 // pred_fallthru
        _
    $region6: #{tpu_custom_call.1} parent=1 // loop_footer
      %s23 = sadd.s32 1, %s19
    $region7: #{tpu_custom_call.1} parent=1 // loop_footer_branch
      %18 = sbr.rel target = $region3
    $region8: #{tpu_custom_call.1} parent=1 // loop_exit
      _
    %649 = vsyncpa [#allocation3], 1
    %s650 = scalar_lea.sflag [#allocation3], 1
    %651 = vsyncpa %s650, 1

</llo_original>
